<compile_context>
chip_gen: v5e
topology: v5e:2x2
jax: 0.10.0
libtpu: 0.0.40
codegen_flags: <defaults>
</compile_context>

<pallas_src>
import jax
import jax.numpy as jnp
from jax.experimental import pallas as pl
from jax.experimental.pallas import tpu as pltpu


def _downsample_kernel(w0_ref, w1_ref, w2_ref, b_ref,
                       x0_ref, x1_ref, x2_ref, out_ref):
    """One (batch, column-tile) block of Conv1d(k=3, s=2, p=1).

    w{0,1,2}_ref : (C_out, C_in)    per-tap weights (resident in VMEM)
    b_ref        : (C_out, 1)       bias (resident)
    x{0,1,2}_ref : (C_in, tile_l)   tap-phase inputs: x_pad[:, 2t+k] for this tile
    out_ref      : (C_out, tile_l)  output columns (lane-dense, multiple of 128)
    """
    acc = jnp.dot(w0_ref[...], x0_ref[...], preferred_element_type=jnp.float32)
    acc = acc + jnp.dot(w1_ref[...], x1_ref[...], preferred_element_type=jnp.float32)
    acc = acc + jnp.dot(w2_ref[...], x2_ref[...], preferred_element_type=jnp.float32)
    acc = acc + b_ref[...].astype(jnp.float32)
    out_ref[...] = acc.astype(out_ref.dtype)


def downsample1d(x, weight, bias, *, max_tile_l=512):
    """Conv1d(dim, dim, kernel_size=3, stride=2, padding=1) on x: [B, C, L]."""
    B, C, L = x.shape
    C_out, C_in, K = weight.shape
    assert C_in == C and C_out == C and K == 3
    assert bias.shape == (C_out,)

    # PyTorch output length: floor((L + 2*1 - 3)/2) + 1
    L_out = (L - 1) // 2 + 1
    # Lane-dense column count (unmasked vst): pad output positions to x128.
    L_out_pad = pl.cdiv(L_out, 128) * 128

    # Zero-pad so every tap index 2*t + k (k in {0,1,2}, t < L_out_pad) exists.
    # Padded length = 2*L_out_pad + 1 (1 on the left = conv padding).
    pad_right = 2 * L_out_pad - L
    x_pad = jnp.pad(x, ((0, 0), (0, 0), (1, pad_right)))      # [B, C, 2*L_out_pad+1]

    # Stride-2 tap phases (layout-only; replaces the old 3x im2col + transpose).
    # x_k[b, c, t] = x_pad[b, c, 2*t + k],   each [B, C, L_out_pad].
    x0 = x_pad[:, :, 0:2 * L_out_pad:2]
    x1 = x_pad[:, :, 1:1 + 2 * L_out_pad:2]
    x2 = x_pad[:, :, 2:2 + 2 * L_out_pad:2]

    # Per-tap weight matrices and bias column.
    w0 = weight[:, :, 0]
    w1 = weight[:, :, 1]
    w2 = weight[:, :, 2]
    bias2d = bias.reshape(C_out, 1)

    # Column tile: a multiple of 128 that divides L_out_pad.
    tile_l = min(max_tile_l, L_out_pad)
    while L_out_pad % tile_l:
        tile_l -= 128
    n_tiles = L_out_pad // tile_l

    # Rough VMEM working set (double-buffered streams + resident weights).
    itemsize = jnp.dtype(x.dtype).itemsize
    vmem_need = (2 * (3 * C * tile_l + C_out * tile_l) * itemsize   # x tiles + out tile
                 + 2 * (3 * C_out * C + C_out) * itemsize)          # weights + bias
    compiler_kwargs = dict(dimension_semantics=("parallel", "parallel"))
    if vmem_need > 24 * 1024 * 1024:
        compiler_kwargs["vmem_limit_bytes"] = int(min(vmem_need + (8 << 20), 120 << 20))

    out_full = pl.pallas_call(
        _downsample_kernel,
        out_shape=jax.ShapeDtypeStruct((B, C_out, L_out_pad), x.dtype),
        grid=(B, n_tiles),
        in_specs=[
            pl.BlockSpec((C_out, C), lambda b, j: (0, 0)),              # w0 (resident)
            pl.BlockSpec((C_out, C), lambda b, j: (0, 0)),              # w1 (resident)
            pl.BlockSpec((C_out, C), lambda b, j: (0, 0)),              # w2 (resident)
            pl.BlockSpec((C_out, 1), lambda b, j: (0, 0)),              # bias (resident)
            pl.BlockSpec((None, C, tile_l), lambda b, j: (b, 0, j)),    # tap-0 phase
            pl.BlockSpec((None, C, tile_l), lambda b, j: (b, 0, j)),    # tap-1 phase
            pl.BlockSpec((None, C, tile_l), lambda b, j: (b, 0, j)),    # tap-2 phase
        ],
        out_specs=pl.BlockSpec((None, C_out, tile_l), lambda b, j: (b, 0, j)),
        compiler_params=pltpu.CompilerParams(**compiler_kwargs),
    )(w0, w1, w2, bias2d, x0, x1, x2)

    # Drop the lane padding (no transpose: kernel already wrote [B, C_out, L]).
    if L_out_pad == L_out:
        return out_full
    return out_full[:, :, :L_out]


if __name__ == "__main__":
    # Downsample1d(dim=4) on x: [batch=2, channels=4, spatial=16]
    B, dim, L = 2, 4, 16

    key = jax.random.PRNGKey(0)
    k_x, k_w, k_b = jax.random.split(key, 3)
    x = jax.random.normal(k_x, (B, dim, L), dtype=jnp.float32)
    weight = jax.random.normal(k_w, (dim, dim, 3), dtype=jnp.float32) * 0.2
    bias = jax.random.normal(k_b, (dim,), dtype=jnp.float32) * 0.1

    out = jax.jit(downsample1d)(x, weight, bias)
    out = jax.block_until_ready(out)

    # Independent reference: XLA conv with the same (kernel=3, stride=2, pad=1).
    ref = jax.lax.conv_general_dilated(
        x, weight,
        window_strides=(2,),
        padding=((1, 1),),
        dimension_numbers=("NCH", "OIH", "NCH"),
        precision=jax.lax.Precision.HIGHEST,
    ) + bias[None, :, None]

    assert out.shape == (B, dim, (L - 1) // 2 + 1), out.shape
    # Kernel uses default MXU precision (single bf16 pass, f32 accumulate), so
    # allow bf16-level tolerance vs. the f32-HIGHEST reference.
    assert jnp.allclose(out, ref, rtol=2e-2, atol=2e-2), (out, ref)

    print("KERNEL_OK")
</pallas_src>

<mosaic_0001>
module attributes {stable_mosaic.version = 11 : i64} {
  func.func @_downsample_kernel(%arg0: i32, %arg1: i32, %arg2: memref<4x4xf32, #tpu.memory_space<vmem>>, %arg3: memref<4x4xf32, #tpu.memory_space<vmem>>, %arg4: memref<4x4xf32, #tpu.memory_space<vmem>>, %arg5: memref<4x1xf32, #tpu.memory_space<vmem>>, %arg6: memref<1x4x128xf32, #tpu.memory_space<vmem>>, %arg7: memref<1x4x128xf32, #tpu.memory_space<vmem>>, %arg8: memref<1x4x128xf32, #tpu.memory_space<vmem>>, %arg9: memref<1x4x128xf32, #tpu.memory_space<vmem>>) attributes {dimension_semantics = [#tpu.dimension_semantics<parallel>, #tpu.dimension_semantics<parallel>], iteration_bounds = array<i64: 2, 1>, scalar_prefetch = 0 : i64, scratch_operands = 0 : i64, tpu.core_type = #tpu.core_type<tc>, window_params = [{pipeline_mode = #tpu.pipeline_mode<synchronous>, transform_indices = @transform_0, window_bounds = array<i64: 4, 4>}, {pipeline_mode = #tpu.pipeline_mode<synchronous>, transform_indices = @transform_1, window_bounds = array<i64: 4, 4>}, {pipeline_mode = #tpu.pipeline_mode<synchronous>, transform_indices = @transform_2, window_bounds = array<i64: 4, 4>}, {pipeline_mode = #tpu.pipeline_mode<synchronous>, transform_indices = @transform_3, window_bounds = array<i64: 4, 1>}, {transform_indices = @transform_4, window_bounds = array<i64: 1, 4, 128>}, {transform_indices = @transform_5, window_bounds = array<i64: 1, 4, 128>}, {transform_indices = @transform_6, window_bounds = array<i64: 1, 4, 128>}, {transform_indices = @transform_7, window_bounds = array<i64: 1, 4, 128>}]} {
    %c0 = arith.constant 0 : index
    %c0_0 = arith.constant 0 : index
    %0 = vector.load %arg2[%c0, %c0_0] : memref<4x4xf32, #tpu.memory_space<vmem>>, vector<4x4xf32>
    %c0_1 = arith.constant 0 : index
    %c0_2 = arith.constant 0 : index
    %c0_3 = arith.constant 0 : index
    %1 = vector.load %arg6[%c0_1, %c0_2, %c0_3] : memref<1x4x128xf32, #tpu.memory_space<vmem>>, vector<1x4x128xf32>
    %2 = vector.shape_cast %1 : vector<1x4x128xf32> to vector<4x128xf32>
    %cst = arith.constant dense<0.000000e+00> : vector<4x128xf32>
    %3 = tpu.matmul %0, %2, %cst {dimension_numbers = #tpu.dot_dimension_numbers<[1], [0], [0], [1], [0, 0, 1, 1], [], []>} : vector<4x4xf32>, vector<4x128xf32>, vector<4x128xf32> -> vector<4x128xf32>
    %c0_4 = arith.constant 0 : index
    %c0_5 = arith.constant 0 : index
    %4 = vector.load %arg3[%c0_4, %c0_5] : memref<4x4xf32, #tpu.memory_space<vmem>>, vector<4x4xf32>
    %c0_6 = arith.constant 0 : index
    %c0_7 = arith.constant 0 : index
    %c0_8 = arith.constant 0 : index
    %5 = vector.load %arg7[%c0_6, %c0_7, %c0_8] : memref<1x4x128xf32, #tpu.memory_space<vmem>>, vector<1x4x128xf32>
    %6 = vector.shape_cast %5 : vector<1x4x128xf32> to vector<4x128xf32>
    %cst_9 = arith.constant dense<0.000000e+00> : vector<4x128xf32>
    %7 = tpu.matmul %4, %6, %cst_9 {dimension_numbers = #tpu.dot_dimension_numbers<[1], [0], [0], [1], [0, 0, 1, 1], [], []>} : vector<4x4xf32>, vector<4x128xf32>, vector<4x128xf32> -> vector<4x128xf32>
    %8 = arith.addf %3, %7 : vector<4x128xf32>
    %c0_10 = arith.constant 0 : index
    %c0_11 = arith.constant 0 : index
    %9 = vector.load %arg4[%c0_10, %c0_11] : memref<4x4xf32, #tpu.memory_space<vmem>>, vector<4x4xf32>
    %c0_12 = arith.constant 0 : index
    %c0_13 = arith.constant 0 : index
    %c0_14 = arith.constant 0 : index
    %10 = vector.load %arg8[%c0_12, %c0_13, %c0_14] : memref<1x4x128xf32, #tpu.memory_space<vmem>>, vector<1x4x128xf32>
    %11 = vector.shape_cast %10 : vector<1x4x128xf32> to vector<4x128xf32>
    %cst_15 = arith.constant dense<0.000000e+00> : vector<4x128xf32>
    %12 = tpu.matmul %9, %11, %cst_15 {dimension_numbers = #tpu.dot_dimension_numbers<[1], [0], [0], [1], [0, 0, 1, 1], [], []>} : vector<4x4xf32>, vector<4x128xf32>, vector<4x128xf32> -> vector<4x128xf32>
    %13 = arith.addf %8, %12 : vector<4x128xf32>
    %c0_16 = arith.constant 0 : index
    %c0_17 = arith.constant 0 : index
    %14 = vector.load %arg5[%c0_16, %c0_17] : memref<4x1xf32, #tpu.memory_space<vmem>>, vector<4x1xf32>
    %15 = vector.broadcast %14 : vector<4x1xf32> to vector<4x128xf32>
    %16 = arith.addf %13, %15 : vector<4x128xf32>
    %c0_18 = arith.constant 0 : index
    %c0_19 = arith.constant 0 : index
    %c0_20 = arith.constant 0 : index
    %17 = vector.load %arg9[%c0_18, %c0_19, %c0_20] : memref<1x4x128xf32, #tpu.memory_space<vmem>>, vector<1x4x128xf32>
    %18 = vector.shape_cast %17 : vector<1x4x128xf32> to vector<4x128xf32>
    %19 = vector.shape_cast %16 : vector<4x128xf32> to vector<1x4x128xf32>
    tpu.vector_store %arg9[%c0_18, %c0_19, %c0_20], %19 {strides = array<i32>} : memref<1x4x128xf32, #tpu.memory_space<vmem>>, vector<1x4x128xf32>,
    return
  }
  func.func @transform_0(%arg0: i32, %arg1: i32) -> (i32, i32) {
    %c0_i32 = arith.constant 0 : i32
    %c0_i32_0 = arith.constant 0 : i32
    %c0_i32_1 = arith.constant 0 : i32
    return %c0_i32, %c0_i32_0 : i32, i32
  }
  func.func @transform_1(%arg0: i32, %arg1: i32) -> (i32, i32) {
    %c0_i32 = arith.constant 0 : i32
    %c0_i32_0 = arith.constant 0 : i32
    %c0_i32_1 = arith.constant 0 : i32
    return %c0_i32, %c0_i32_0 : i32, i32
  }
  func.func @transform_2(%arg0: i32, %arg1: i32) -> (i32, i32) {
    %c0_i32 = arith.constant 0 : i32
    %c0_i32_0 = arith.constant 0 : i32
    %c0_i32_1 = arith.constant 0 : i32
    return %c0_i32, %c0_i32_0 : i32, i32
  }
  func.func @transform_3(%arg0: i32, %arg1: i32) -> (i32, i32) {
    %c0_i32 = arith.constant 0 : i32
    %c0_i32_0 = arith.constant 0 : i32
    %c0_i32_1 = arith.constant 0 : i32
    return %c0_i32, %c0_i32_0 : i32, i32
  }
  func.func @transform_4(%arg0: i32, %arg1: i32) -> (i32, i32, i32) {
    %c0_i32 = arith.constant 0 : i32
    %c0_i32_0 = arith.constant 0 : i32
    return %arg0, %c0_i32, %arg1 : i32, i32, i32
  }
  func.func @transform_5(%arg0: i32, %arg1: i32) -> (i32, i32, i32) {
    %c0_i32 = arith.constant 0 : i32
    %c0_i32_0 = arith.constant 0 : i32
    return %arg0, %c0_i32, %arg1 : i32, i32, i32
  }
  func.func @transform_6(%arg0: i32, %arg1: i32) -> (i32, i32, i32) {
    %c0_i32 = arith.constant 0 : i32
    %c0_i32_0 = arith.constant 0 : i32
    return %arg0, %c0_i32, %arg1 : i32, i32, i32
  }
  func.func @transform_7(%arg0: i32, %arg1: i32) -> (i32, i32, i32) {
    %c0_i32 = arith.constant 0 : i32
    %c0_i32_0 = arith.constant 0 : i32
    return %arg0, %c0_i32, %arg1 : i32, i32, i32
  }
}

</mosaic_0001>

<llo_original>
// kernel: downsample1d.1
$region0: #{downsample1d.1}
  #allocation0 [shape = 'u32[]', space=smem, size = 0x4, offset = 0x4, fixed_abs, tag = 'smem constant byte address 0x4 - core index']
  #allocation1 [shape = 'u32[72,128]{1,0:T(1,128)}', space=vmem, size = 0x9000, scoped, tag = 'internal scratch']
  %s0 = inlined_call_operand.vmem [shape: f32[4,4], index: 0, kind: input, shape index: {}]
  %s1 = inlined_call_operand.vmem [shape: f32[4,4], index: 1, kind: input, shape index: {}]
  %s2 = inlined_call_operand.vmem [shape: f32[4,4], index: 2, kind: input, shape index: {}]
  %s3 = inlined_call_operand.vmem [shape: f32[4,1], index: 3, kind: input, shape index: {}]
  %s4 = inlined_call_operand.vmem [shape: f32[2,4,128], index: 4, kind: input, shape index: {}]
  %s5 = inlined_call_operand.vmem [shape: f32[2,4,128], index: 5, kind: input, shape index: {}]
  %s6 = inlined_call_operand.vmem [shape: f32[2,4,128], index: 6, kind: input, shape index: {}]
  %s7 = inlined_call_operand.hbm [shape: f32[2,4,128], index: 7, kind: output, shape index: {}]
  %s8 = sld [smem:[#allocation0]]
  $region61: #{downsample1d.1} parent=0
    _
  %s10 = ssub.s32 1, %s8
  %s11 = scalar_select 0, %s10, %s8
  $region1: #{downsample1d.1} parent=0
    #allocation2 [shape = 'u8[4096]{0}', space=vmem, size = 0x1000, scoped, tag = 'output window, operand 0']
    #allocation3 [shape = 's32[2]{0}', space=sflag, size = 0x8, scoped, tag = 'scoped memory for downsample1d.1']
    %12 = vsyncpa [#allocation3], 0
    %s13 = scalar_lea.sflag [#allocation3], 1
    %14 = vsyncpa %s13, 0
    loop: start=0, step=1, limit=4
    $region2: #{downsample1d.1} parent=1 // loop_pre_header
      _
    $region3: #{downsample1d.1} parent=1 // loop_header
      %s16 = sphi 0, %s20
      %p17 = scmp.ge.s32.totalorder %s16, 4
      %s23 = sphi 0, %s35
      %s24 = sphi 0, %s31
      %s25 = sphi 0, %s23
      %s26 = sphi 0, %s24
      %s27 = sphi 0, %s25
      %s28 = sphi 0, %s26
      %s36 = sphi 0, %s36
      %s38 = sphi 0, %s36
      %s39 = sphi 0, %s38
      %s53 = sphi 0, %s39
      %s57 = sphi 0, %s57
      %s59 = sphi 0, %s57
      %s60 = sphi 0, %s59
      %s74 = sphi 0, %s60
      %s78 = sphi 0, %s78
      %s80 = sphi 0, %s78
      %s81 = sphi 0, %s80
      %s95 = sphi 0, %s81
      %s99 = sphi 0, %s99
      %s101 = sphi 0, %s99
      %s102 = sphi 0, %s101
      %s116 = sphi 0, %s102
      %s124 = sphi 0, %s126
      %s127 = sphi 0, %s124
      %s128 = sphi 0, %s127
      %s144 = sphi 0, %s128
      %s152 = sphi 0, %s154
      %s155 = sphi 0, %s152
      %s156 = sphi 0, %s155
      %s172 = sphi 0, %s156
      %s180 = sphi 0, %s182
      %s183 = sphi 0, %s180
      %s184 = sphi 0, %s183
      %s200 = sphi 0, %s184
      %s208 = sphi 0, %s210
      %s211 = sphi 0, %s208
      %s212 = sphi 0, %s211
      %s228 = sphi 0, %s212
    $region4: #{downsample1d.1} parent=1 // loop_header_branch
      %19 = sbr.rel (%p17) target = $region8
    $region5: #{downsample1d.1} parent=1 // loop_body
      %s21 = ssub.s32 %s16, 1
      %s22 = ssub.s32 %s16, 2
      %s29 = sadd.s32 1, %s24
      %p30 = scmp.ge.s32.totalorder %s29, 1
      %s31 = scalar_select %p30, 0, %s29
      %s32 = sadd.s32 1, %s23
      %s33 = scalar_select %p30, %s32, %s23
      %p34 = scmp.ge.s32.totalorder %s33, 2
      %s35 = scalar_select %p34, 0, %s33
      %s37 = sadd.s32 %s36, 1
      %p40 = scmp.eq.s32.totalorder %s16, 1
      %p41 = scmp.ne.s32.totalorder %s36, %s38
      %p42 = scmp.eq.s32.totalorder %s16, 0
      %p43 = por %p41, %p42
      %p44 = scmp.ne.s32.totalorder %s36, %s38
      %p45 = scmp.eq.s32.totalorder %s21, 1
      %p46 = por %p44, %p45
      %p47 = scmp.ne.s32.totalorder %s38, %s39
      %p48 = scmp.eq.s32.totalorder %s21, 0
      %p49 = por %p47, %p48
      %p50 = scmp.ne.s32.totalorder %s38, %s39
      %p51 = scmp.eq.s32.totalorder %s22, 1
      %p52 = por %p50, %p51
      %p54 = scmp.ne.s32.totalorder %s39, %s53
      %p55 = scmp.eq.s32.totalorder %s22, 0
      %p56 = por %p54, %p55
      %s58 = sadd.s32 %s57, 1
      %p61 = scmp.eq.s32.totalorder %s16, 1
      %p62 = scmp.ne.s32.totalorder %s57, %s59
      %p63 = scmp.eq.s32.totalorder %s16, 0
      %p64 = por %p62, %p63
      %p65 = scmp.ne.s32.totalorder %s57, %s59
      %p66 = scmp.eq.s32.totalorder %s21, 1
      %p67 = por %p65, %p66
      %p68 = scmp.ne.s32.totalorder %s59, %s60
      %p69 = scmp.eq.s32.totalorder %s21, 0
      %p70 = por %p68, %p69
      %p71 = scmp.ne.s32.totalorder %s59, %s60
      %p72 = scmp.eq.s32.totalorder %s22, 1
      %p73 = por %p71, %p72
      %p75 = scmp.ne.s32.totalorder %s60, %s74
      %p76 = scmp.eq.s32.totalorder %s22, 0
      %p77 = por %p75, %p76
      %s79 = sadd.s32 %s78, 1
      %p82 = scmp.eq.s32.totalorder %s16, 1
      %p83 = scmp.ne.s32.totalorder %s78, %s80
      %p84 = scmp.eq.s32.totalorder %s16, 0
      %p85 = por %p83, %p84
      %p86 = scmp.ne.s32.totalorder %s78, %s80
      %p87 = scmp.eq.s32.totalorder %s21, 1
      %p88 = por %p86, %p87
      %p89 = scmp.ne.s32.totalorder %s80, %s81
      %p90 = scmp.eq.s32.totalorder %s21, 0
      %p91 = por %p89, %p90
      %p92 = scmp.ne.s32.totalorder %s80, %s81
      %p93 = scmp.eq.s32.totalorder %s22, 1
      %p94 = por %p92, %p93
      %p96 = scmp.ne.s32.totalorder %s81, %s95
      %p97 = scmp.eq.s32.totalorder %s22, 0
      %p98 = por %p96, %p97
      %s100 = sadd.s32 %s99, 1
      %p103 = scmp.eq.s32.totalorder %s16, 1
      %p104 = scmp.ne.s32.totalorder %s99, %s101
      %p105 = scmp.eq.s32.totalorder %s16, 0
      %p106 = por %p104, %p105
      %p107 = scmp.ne.s32.totalorder %s99, %s101
      %p108 = scmp.eq.s32.totalorder %s21, 1
      %p109 = por %p107, %p108
      %p110 = scmp.ne.s32.totalorder %s101, %s102
      %p111 = scmp.eq.s32.totalorder %s21, 0
      %p112 = por %p110, %p111
      %p113 = scmp.ne.s32.totalorder %s101, %s102
      %p114 = scmp.eq.s32.totalorder %s22, 1
      %p115 = por %p113, %p114
      %p117 = scmp.ne.s32.totalorder %s102, %s116
      %p118 = scmp.eq.s32.totalorder %s22, 0
      %p119 = por %p117, %p118
      %s120 = ssub.s32 %s23, %s35
      %s121 = ssub.s32 %s24, %s31
      %s122 = sor.u32 %s120, %s121
      %p123 = scmp.eq.s32.totalorder %s122, 0
      %s125 = sadd.s32 %s124, 1
      %s126 = scalar_select %p123, %s124, %s125
      %p129 = pneg %p123
      %p130 = scmp.eq.s32.totalorder %s16, 1
      %p131 = por %p129, %p130
      %p132 = scmp.ne.s32.totalorder %s124, %s127
      %p133 = scmp.eq.s32.totalorder %s16, 0
      %p134 = por %p132, %p133
      %p135 = scmp.ne.s32.totalorder %s124, %s127
      %p136 = scmp.eq.s32.totalorder %s21, 1
      %p137 = por %p135, %p136
      %p138 = scmp.ne.s32.totalorder %s127, %s128
      %p139 = scmp.eq.s32.totalorder %s21, 0
      %p140 = por %p138, %p139
      %p141 = scmp.ne.s32.totalorder %s127, %s128
      %p142 = scmp.eq.s32.totalorder %s22, 1
      %p143 = por %p141, %p142
      %p145 = scmp.ne.s32.totalorder %s128, %s144
      %p146 = scmp.eq.s32.totalorder %s22, 0
      %p147 = por %p145, %p146
      %s148 = ssub.s32 %s23, %s35
      %s149 = ssub.s32 %s24, %s31
      %s150 = sor.u32 %s148, %s149
      %p151 = scmp.eq.s32.totalorder %s150, 0
      %s153 = sadd.s32 %s152, 1
      %s154 = scalar_select %p151, %s152, %s153
      %p157 = pneg %p151
      %p158 = scmp.eq.s32.totalorder %s16, 1
      %p159 = por %p157, %p158
      %p160 = scmp.ne.s32.totalorder %s152, %s155
      %p161 = scmp.eq.s32.totalorder %s16, 0
      %p162 = por %p160, %p161
      %p163 = scmp.ne.s32.totalorder %s152, %s155
      %p164 = scmp.eq.s32.totalorder %s21, 1
      %p165 = por %p163, %p164
      %p166 = scmp.ne.s32.totalorder %s155, %s156
      %p167 = scmp.eq.s32.totalorder %s21, 0
      %p168 = por %p166, %p167
      %p169 = scmp.ne.s32.totalorder %s155, %s156
      %p170 = scmp.eq.s32.totalorder %s22, 1
      %p171 = por %p169, %p170
      %p173 = scmp.ne.s32.totalorder %s156, %s172
      %p174 = scmp.eq.s32.totalorder %s22, 0
      %p175 = por %p173, %p174
      %s176 = ssub.s32 %s23, %s35
      %s177 = ssub.s32 %s24, %s31
      %s178 = sor.u32 %s176, %s177
      %p179 = scmp.eq.s32.totalorder %s178, 0
      %s181 = sadd.s32 %s180, 1
      %s182 = scalar_select %p179, %s180, %s181
      %p185 = pneg %p179
      %p186 = scmp.eq.s32.totalorder %s16, 1
      %p187 = por %p185, %p186
      %p188 = scmp.ne.s32.totalorder %s180, %s183
      %p189 = scmp.eq.s32.totalorder %s16, 0
      %p190 = por %p188, %p189
      %p191 = scmp.ne.s32.totalorder %s180, %s183
      %p192 = scmp.eq.s32.totalorder %s21, 1
      %p193 = por %p191, %p192
      %p194 = scmp.ne.s32.totalorder %s183, %s184
      %p195 = scmp.eq.s32.totalorder %s21, 0
      %p196 = por %p194, %p195
      %p197 = scmp.ne.s32.totalorder %s183, %s184
      %p198 = scmp.eq.s32.totalorder %s22, 1
      %p199 = por %p197, %p198
      %p201 = scmp.ne.s32.totalorder %s184, %s200
      %p202 = scmp.eq.s32.totalorder %s22, 0
      %p203 = por %p201, %p202
      %s204 = ssub.s32 %s23, %s35
      %s205 = ssub.s32 %s24, %s31
      %s206 = sor.u32 %s204, %s205
      %p207 = scmp.eq.s32.totalorder %s206, 0
      %s209 = sadd.s32 %s208, 1
      %s210 = scalar_select %p207, %s208, %s209
      %p213 = pneg %p207
      %p214 = scmp.eq.s32.totalorder %s16, 1
      %p215 = por %p213, %p214
      %p216 = scmp.ne.s32.totalorder %s208, %s211
      %p217 = scmp.eq.s32.totalorder %s16, 0
      %p218 = por %p216, %p217
      %p219 = scmp.ne.s32.totalorder %s208, %s211
      %p220 = scmp.eq.s32.totalorder %s21, 1
      %p221 = por %p219, %p220
      %p222 = scmp.ne.s32.totalorder %s211, %s212
      %p223 = scmp.eq.s32.totalorder %s21, 0
      %p224 = por %p222, %p223
      %p225 = scmp.ne.s32.totalorder %s211, %s212
      %p226 = scmp.eq.s32.totalorder %s22, 1
      %p227 = por %p225, %p226
      %p229 = scmp.ne.s32.totalorder %s212, %s228
      %p230 = scmp.eq.s32.totalorder %s22, 0
      %p231 = por %p229, %p230
      %p232 = scmp.le.s32.totalorder 1, %s16
      %p233 = scmp.lt.s32.totalorder %s16, 3
      %p234 = pnand %p232, %p233
      %p235 = pneg %p234
      // Predicated region
      $region9: #{downsample1d.1} parent=5 // pred_check
        _
      $region10: #{downsample1d.1} parent=5 // pred_check_branch
        %237 = sbr.rel (%p234) target = $region12
      $region11: #{downsample1d.1} parent=5 // pred_region
        %s238 = ssub.s32 %s16, 1
        // Predicated region
        $region13: #{downsample1d.1} parent=11 // pred_check
          %p239 = pneg %p49
        $region14: #{downsample1d.1} parent=11 // pred_check_branch
          %241 = sbr.rel (%p239) target = $region16
        $region15: #{downsample1d.1} parent=11 // pred_region
          _
        $region16: #{downsample1d.1} parent=11 // pred_fallthru
          _
        // Predicated region
        $region17: #{downsample1d.1} parent=11 // pred_check
          %p242 = pneg %p70
        $region18: #{downsample1d.1} parent=11 // pred_check_branch
          %244 = sbr.rel (%p242) target = $region20
        $region19: #{downsample1d.1} parent=11 // pred_region
          _
        $region20: #{downsample1d.1} parent=11 // pred_fallthru
          _
        // Predicated region
        $region21: #{downsample1d.1} parent=11 // pred_check
          %p245 = pneg %p91
        $region22: #{downsample1d.1} parent=11 // pred_check_branch
          %247 = sbr.rel (%p245) target = $region24
        $region23: #{downsample1d.1} parent=11 // pred_region
          _
        $region24: #{downsample1d.1} parent=11 // pred_fallthru
          _
        // Predicated region
        $region25: #{downsample1d.1} parent=11 // pred_check
          %p248 = pneg %p112
        $region26: #{downsample1d.1} parent=11 // pred_check_branch
          %250 = sbr.rel (%p248) target = $region28
        $region27: #{downsample1d.1} parent=11 // pred_region
          _
        $region28: #{downsample1d.1} parent=11 // pred_fallthru
          _
      $region12: #{downsample1d.1} parent=5 // pred_fallthru
        _
      %p251 = scmp.lt.s32.totalorder %s16, 2
      // Predicated region
      $region29: #{downsample1d.1} parent=5 // pred_check
        %p252 = pneg %p251
      $region30: #{downsample1d.1} parent=5 // pred_check_branch
        %254 = sbr.rel (%p252) target = $region32
      $region31: #{downsample1d.1} parent=5 // pred_region
        // Predicated region
        $region33: #{downsample1d.1} parent=31 // pred_check
          %p255 = pneg %p134
        $region34: #{downsample1d.1} parent=31 // pred_check_branch
          %257 = sbr.rel (%p255) target = $region36
        $region35: #{downsample1d.1} parent=31 // pred_region
          %p258 = scmp.lt.s32.totalorder %s23, 1
          %s259 = scalar_select %p258, %s23, 1
          %p260 = scmp.lt.s32.totalorder %s24, 0
          %s261 = scalar_select %p260, %s24, 0
          %s262 = sadd.s32 %s261, %s259
          %s263 = smul.addr %s262, 4
          %s264 = scalar_lea.vmem %s4, %s263
        $region36: #{downsample1d.1} parent=31 // pred_fallthru
          _
        // Predicated region
        $region37: #{downsample1d.1} parent=31 // pred_check
          %p265 = pneg %p162
        $region38: #{downsample1d.1} parent=31 // pred_check_branch
          %267 = sbr.rel (%p265) target = $region40
        $region39: #{downsample1d.1} parent=31 // pred_region
          %p268 = scmp.lt.s32.totalorder %s23, 1
          %s269 = scalar_select %p268, %s23, 1
          %p270 = scmp.lt.s32.totalorder %s24, 0
          %s271 = scalar_select %p270, %s24, 0
          %s272 = sadd.s32 %s271, %s269
          %s273 = smul.addr %s272, 4
          %s274 = scalar_lea.vmem %s5, %s273
        $region40: #{downsample1d.1} parent=31 // pred_fallthru
          _
        // Predicated region
        $region41: #{downsample1d.1} parent=31 // pred_check
          %p275 = pneg %p190
        $region42: #{downsample1d.1} parent=31 // pred_check_branch
          %277 = sbr.rel (%p275) target = $region44
        $region43: #{downsample1d.1} parent=31 // pred_region
          %p278 = scmp.lt.s32.totalorder %s23, 1
          %s279 = scalar_select %p278, %s23, 1
          %p280 = scmp.lt.s32.totalorder %s24, 0
          %s281 = scalar_select %p280, %s24, 0
          %s282 = sadd.s32 %s281, %s279
          %s283 = smul.addr %s282, 4
          %s284 = scalar_lea.vmem %s6, %s283
        $region44: #{downsample1d.1} parent=31 // pred_fallthru
          _
      $region32: #{downsample1d.1} parent=5 // pred_fallthru
        _
      %p285 = scmp.le.s32.totalorder 1, %s16
      %p286 = scmp.lt.s32.totalorder %s16, 3
      %p287 = pnand %p285, %p286
      %p288 = pneg %p287
      // Predicated region
      $region45: #{downsample1d.1} parent=5 // pred_check
        _
      $region46: #{downsample1d.1} parent=5 // pred_check_branch
        %290 = sbr.rel (%p287) target = $region48
      $region47: #{downsample1d.1} parent=5 // pred_region
        %s291 = ssub.s32 %s16, 1
        %p292 = pneg %p49
        %p293 = pneg %p46
        %p294 = pneg %p70
        %p295 = pneg %p67
        %p296 = pneg %p91
        %p297 = pneg %p88
        %p298 = pneg %p112
        %p299 = pneg %p109
        %p300 = scmp.lt.s32.totalorder %s25, 1
        %s301 = scalar_select %p300, %s25, 1
        %p302 = scmp.lt.s32.totalorder %s26, 0
        %s303 = scalar_select %p302, %s26, 0
        %s304 = sadd.s32 %s303, %s301
        %s305 = smul.addr %s304, 4
        %s306 = scalar_lea.vmem %s4, %s305
        %p307 = pneg %p140
        %p308 = pneg %p137
        %p309 = scmp.lt.s32.totalorder %s25, 1
        %s310 = scalar_select %p309, %s25, 1
        %p311 = scmp.lt.s32.totalorder %s26, 0
        %s312 = scalar_select %p311, %s26, 0
        %s313 = sadd.s32 %s312, %s310
        %s314 = smul.addr %s313, 4
        %s315 = scalar_lea.vmem %s5, %s314
        %p316 = pneg %p168
        %p317 = pneg %p165
        %p318 = scmp.lt.s32.totalorder %s25, 1
        %s319 = scalar_select %p318, %s25, 1
        %p320 = scmp.lt.s32.totalorder %s26, 0
        %s321 = scalar_select %p320, %s26, 0
        %s322 = sadd.s32 %s321, %s319
        %s323 = smul.addr %s322, 4
        %s324 = scalar_lea.vmem %s6, %s323
        %p325 = pneg %p196
        %p326 = pneg %p193
        %p327 = pneg %p224
        %p328 = pneg %p221
        %s329 = sand.u32 %s211, 1
        %s330 = scalar_lea.sflag [#allocation3], %s329
        %s331 = sand.u32 %s211, 1
        %s332 = smul.addr %s331, 4
        %s333 = scalar_lea.vmem [#allocation2], %s332
        %p334 = scmp.lt.s32.totalorder %s25, 1
        %s335 = scalar_select %p334, %s25, 1
        %p336 = scmp.lt.s32.totalorder %s26, 0
        %s337 = scalar_select %p336, %s26, 0
        %s338 = sadd.s32 %s337, %s335
        %s339 = smul.addr %s338, 4
        %s340 = scalar_lea.vmem %s4, %s339
        %p341 = scmp.lt.s32.totalorder %s25, 1
        %s342 = scalar_select %p341, %s25, 1
        %p343 = scmp.lt.s32.totalorder %s26, 0
        %s344 = scalar_select %p343, %s26, 0
        %s345 = sadd.s32 %s344, %s342
        %s346 = smul.addr %s345, 4
        %s347 = scalar_lea.vmem %s5, %s346
        %p348 = scmp.lt.s32.totalorder %s25, 1
        %s349 = scalar_select %p348, %s25, 1
        %p350 = scmp.lt.s32.totalorder %s26, 0
        %s351 = scalar_select %p350, %s26, 0
        %s352 = sadd.s32 %s351, %s349
        %s353 = smul.addr %s352, 4
        %s354 = scalar_lea.vmem %s6, %s353
        %v355 = vld [vmem:[%s0] sm:$0xf]
        %v356 = vld [vmem:[%s340] sm:$0xf]
        %v357 = vld [vmem:[%s1] sm:$0xf]
        %v358 = vld [vmem:[%s347] sm:$0xf]
        %vm359 = vcmask 31744
        %v361 = vsel %vm359, %v357, 0
        %vm363 = vcmask 1043456
        %v365 = vsel %vm363, %v358, 0
        %367 = vmatpush.msra.mxu0 0.0
        %368 = vmatpush.msra.mxu0 0.0
        %369 = vmatpush.msra.mxu0 0.0
        %370 = vmatpush.msra.mxu0 0.0
        %371 = vmatpush.msra.mxu0 0.0
        %372 = vmatpush.msra.mxu0 0.0
        %373 = vmatpush.msra.mxu0 0.0
        %374 = vmatpush.msra.mxu0 0.0
        %375 = vmatpush.msra.mxu0 0.0
        %376 = vmatpush.msra.mxu0 0.0
        %377 = vmatpush.msra.mxu0 0.0
        %378 = vmatpush.msra.mxu0 0.0
        %379 = vmatpush.msra.mxu0 0.0
        %380 = vmatpush.msra.mxu0 0.0
        %381 = vmatpush.msra.mxu0 0.0
        %382 = vmatpush.msra.mxu0 %v365
        %383 = vmatmul.f32.gmra.mxu0 %v361
        %v384 = vpop.f32.mrf.mxu0
        %v385 = vadd.f32 0.0, %v384
        %386 = vdwg.mxu0
        %v388 = vsel %vm359, %v355, 0
        %v391 = vsel %vm363, %v356, 0
        %393 = vmatpush.msra.mxu0 0.0
        %394 = vmatpush.msra.mxu0 0.0
        %395 = vmatpush.msra.mxu0 0.0
        %396 = vmatpush.msra.mxu0 0.0
        %397 = vmatpush.msra.mxu0 0.0
        %398 = vmatpush.msra.mxu0 0.0
        %399 = vmatpush.msra.mxu0 0.0
        %400 = vmatpush.msra.mxu0 0.0
        %401 = vmatpush.msra.mxu0 0.0
        %402 = vmatpush.msra.mxu0 0.0
        %403 = vmatpush.msra.mxu0 0.0
        %404 = vmatpush.msra.mxu0 0.0
        %405 = vmatpush.msra.mxu0 0.0
        %406 = vmatpush.msra.mxu0 0.0
        %407 = vmatpush.msra.mxu0 0.0
        %408 = vmatpush.msra.mxu0 %v391
        %409 = vmatmul.f32.gmra.mxu0 %v388
        %v410 = vpop.f32.mrf.mxu0
        %v411 = vadd.f32 %v385, %v410
        %412 = vdwg.mxu0
        %v413 = vld [vmem:[%s2] sm:$0xf]
        %v414 = vld [vmem:[%s354] sm:$0xf]
        %v416 = vsel %vm359, %v413, 0
        %v419 = vsel %vm363, %v414, 0
        %421 = vmatpush.msra.mxu0 0.0
        %422 = vmatpush.msra.mxu0 0.0
        %423 = vmatpush.msra.mxu0 0.0
        %424 = vmatpush.msra.mxu0 0.0
        %425 = vmatpush.msra.mxu0 0.0
        %426 = vmatpush.msra.mxu0 0.0
        %427 = vmatpush.msra.mxu0 0.0
        %428 = vmatpush.msra.mxu0 0.0
        %429 = vmatpush.msra.mxu0 0.0
        %430 = vmatpush.msra.mxu0 0.0
        %431 = vmatpush.msra.mxu0 0.0
        %432 = vmatpush.msra.mxu0 0.0
        %433 = vmatpush.msra.mxu0 0.0
        %434 = vmatpush.msra.mxu0 0.0
        %435 = vmatpush.msra.mxu0 0.0
        %436 = vmatpush.msra.mxu0 %v419
        %437 = vmatmul.f32.gmra.mxu0 %v416
        %v438 = vpop.f32.mrf.mxu0
        %v439 = vadd.f32 0.0, %v438
        %440 = vdwg.mxu0
        %v441 = vadd.f32 %v411, %v439
        %v442 = vld [vmem:[%s3] sm:$0xf]
        %444 = vset.pattern.permute.xlu0 0
        %445 = vperm.xlu0 %444, %v442
        %v446 = vpop.permute.xlu0 %445
        %v448 = vadd.f32 %v441, %v446
        %449 = vst [vmem:[%s333] sm:$0xf] %v448
        %s450 = sand.u32 %s211, 1
        %s451 = scalar_lea.sflag [#allocation3], %s450
        %s452 = sand.u32 %s211, 1
        %s453 = smul.addr %s452, 4
        %s454 = scalar_lea.vmem [#allocation2], %s453
        // Predicated region
        $region49: #{downsample1d.1} parent=47 // pred_check
          %p455 = pneg %p221
        $region50: #{downsample1d.1} parent=47 // pred_check_branch
          %457 = sbr.rel (%p455) target = $region52
        $region51: #{downsample1d.1} parent=47 // pred_region
          %459 = vsyncadd %s451, 0
          %s460 = sadd.s32 %s26, %s25
          %s461 = smul.addr %s460, 4
          %s462 = scalar_lea.hbm %s7, %s461
          %s464 = sshll.u32 %s454, 4
          %s465 = int_to_ptr.vmem [resolvable:$true] %s464
          %s466 = sshll.u32 %s462, 4
          %s467 = int_to_ptr.hbm [resolvable:$true] %s466
          %469 = dma.vmem_to_hbm [thread:$0]  %s465, 64, %s467, %s451
        $region52: #{downsample1d.1} parent=47 // pred_fallthru
          _
      $region48: #{downsample1d.1} parent=5 // pred_fallthru
        _
      %p470 = scmp.le.s32.totalorder 2, %s16
      // Predicated region
      $region53: #{downsample1d.1} parent=5 // pred_check
        %p471 = pneg %p470
      $region54: #{downsample1d.1} parent=5 // pred_check_branch
        %473 = sbr.rel (%p471) target = $region56
      $region55: #{downsample1d.1} parent=5 // pred_region
        %s474 = ssub.s32 %s16, 2
        // Predicated region
        $region57: #{downsample1d.1} parent=55 // pred_check
          %p475 = pneg %p227
        $region58: #{downsample1d.1} parent=55 // pred_check_branch
          %477 = sbr.rel (%p475) target = $region60
        $region59: #{downsample1d.1} parent=55 // pred_region
          %s478 = sand.u32 %s212, 1
          %s479 = scalar_lea.sflag [#allocation3], %s478
          %s480 = sand.u32 %s212, 1
          %s481 = smul.addr %s480, 4
          %s482 = scalar_lea.vmem [#allocation2], %s481
          %484 = dma.done %s479, 64
        $region60: #{downsample1d.1} parent=55 // pred_fallthru
          _
      $region56: #{downsample1d.1} parent=5 // pred_fallthru
        _
    $region6: #{downsample1d.1} parent=1 // loop_footer
      %s20 = sadd.s32 1, %s16
    $region7: #{downsample1d.1} parent=1 // loop_footer_branch
      %15 = sbr.rel target = $region3
    $region8: #{downsample1d.1} parent=1 // loop_exit
      _
    %485 = vsyncpa [#allocation3], 1
    %s486 = scalar_lea.sflag [#allocation3], 1
    %487 = vsyncpa %s486, 1

</llo_original>
